<compile_context>
chip_gen: v7x
topology: tpu7x:2x2x1
jax: 0.10.0
libtpu: 0.0.40
codegen_flags: <defaults>
</compile_context>

<pallas_src>
import jax
import jax.numpy as jnp
import numpy as np
from jax import lax
from jax.experimental import pallas as pl
from jax.experimental.pallas import tpu as pltpu

FS = 16                      # sampling_rate
B = 2                        # batch
C_IN = 3
L_IN = 127
K1, S1 = FS // 2, FS // 16   # conv1 kernel / stride  -> 8, 1
C1 = 16
P1_K = 8                     # maxpool1 kernel == stride
K2, S2 = 8, FS // 16         # conv2 kernel / stride  -> 8, 1
C2 = 128
P2_K = 4                     # maxpool2 kernel == stride
N_CLS = 5
EPS = 1e-5

L_CONV1 = (L_IN - K1) // S1 + 1        # 120
L_POOL1 = L_CONV1 // P1_K              # 15
L_CONV2 = (L_POOL1 - K2) // S2 + 1     # 8
L_POOL2 = L_CONV2 // P2_K              # 2
assert S1 == 1 and S2 == 1             # fs=16 gives unit strides (kernel assumes this)
assert C2 * L_POOL2 == 128 * 2         # matches x.view(-1, 128*2)
assert L_CONV1 % P1_K == 0 and L_CONV2 % P2_K == 0


def convmodel_kernel(xcol_ref, w1_ref, s1_ref, t1_ref,
                     w2_ref, s2_ref, t2_ref, wf_ref, bf_ref, o_ref):
    """Whole ConvModelA forward, batch folded into the matmul M dimension.

    xcol_ref : (B*120, 24)   conv1 im2col (row = b*120+t, col = c*8+k)
    w1_ref   : (24, 16)      conv1 weight, pre-transposed
    s1/t1    : (1, 16)       BN1(eval) scale / shift (conv1 bias folded in)
    w2_ref   : (128, 128)    conv2 weight, rows ordered k*16+c
    s2/t2    : (1, 128)      BN2(eval) scale / shift (conv2 bias folded in)
    wf_ref   : (256, 5)      fc weight, rows ordered t*128+c
    bf_ref   : (1, 5)
    o_ref    : (B, 5)
    """
    nb = o_ref.shape[0]

    # ---- conv1: a single im2col matmul, contraction = C_IN*K1 = 24 -> (B*120, 16)
    h1 = jnp.dot(xcol_ref[...], w1_ref[...], preferred_element_type=jnp.float32)
    h1 = jnp.maximum(h1 * s1_ref[...] + t1_ref[...], 0.0)          # BN(eval)+bias+ReLU

    # ---- maxpool1 (k=s=8): regroup rows (minor dim untouched, vreg-aligned) + reduce
    h1p = jnp.max(h1.reshape(nb, L_POOL1, P1_K, C1), axis=2)       # (B, 15, 16)

    # TODO(synk): nn.Dropout(p=0.5) is eval-mode identity here (no RNG masking).

    # ---- conv2 im2col built in-kernel: 8 tap slices concatenated on the lane axis;
    #      column order k*16+c matches the pre-transposed w2_ref rows.
    h1col = jnp.concatenate(
        [h1p[:, k:k + L_CONV2, :] for k in range(K2)], axis=-1)    # (B, 8, 128)
    h1col = h1col.reshape(nb * L_CONV2, C1 * K2)                   # (B*8, 128)

    # ---- conv2: a single matmul, contraction = C1*K2 = 128 -> (B*8, 128)
    h2 = jnp.dot(h1col, w2_ref[...], preferred_element_type=jnp.float32)
    h2 = jnp.maximum(h2 * s2_ref[...] + t2_ref[...], 0.0)          # BN(eval)+bias+ReLU

    # ---- maxpool2 (k=s=4): same row-regroup + reduce -> (B, 2, 128)
    h2p = jnp.max(h2.reshape(nb, L_POOL2, P2_K, C2), axis=2)

    # ---- flatten (t-major; wf pre-permuted to match) + Linear(256 -> 5) as one MXU dot
    h2flat = jnp.concatenate(
        [h2p[:, t, :] for t in range(L_POOL2)], axis=-1)           # (B, 256)
    o_ref[...] = jnp.dot(h2flat, wf_ref[...],
                         preferred_element_type=jnp.float32) + bf_ref[...]


def conv_model_a_forward(x, p):
    """Glue: fold BN eval stats + conv biases, im2col x, pre-transpose weights."""
    nb = x.shape[0]
    s1 = p['g1'] / jnp.sqrt(p['rv1'] + EPS)
    t1 = p['be1'] + s1 * (p['b1'] - p['rm1'])          # conv1 bias folded into shift
    s2 = p['g2'] / jnp.sqrt(p['rv2'] + EPS)
    t2 = p['be2'] + s2 * (p['b2'] - p['rm2'])          # conv2 bias folded into shift

    # conv1 im2col, length-major: row = b*120+t, col = c*8+k
    wins = jnp.stack([x[:, :, k:k + L_CONV1] for k in range(K1)], axis=-1)  # (B,3,120,8)
    x_colT = wins.transpose(0, 2, 1, 3).reshape(nb * L_CONV1, C_IN * K1)    # (B*120, 24)

    w1T = p['w1'].reshape(C1, C_IN * K1).T                              # (24, 16)
    w2T = jnp.transpose(p['w2'], (2, 1, 0)).reshape(C1 * K2, C2)        # (128, 128), row k*16+c
    wfT = jnp.transpose(p['wf'].reshape(N_CLS, C2, L_POOL2),
                        (2, 1, 0)).reshape(C2 * L_POOL2, N_CLS)         # (256, 5), row t*128+c

    vmem = pl.BlockSpec(memory_space=pltpu.MemorySpace.VMEM)
    out = pl.pallas_call(
        convmodel_kernel,
        out_shape=jax.ShapeDtypeStruct((nb, N_CLS), jnp.float32),
        in_specs=[vmem] * 9,
        out_specs=vmem,
    )(x_colT.astype(jnp.float32), w1T.astype(jnp.float32),
      s1.reshape(1, C1), t1.reshape(1, C1),
      w2T.astype(jnp.float32), s2.reshape(1, C2), t2.reshape(1, C2),
      wfT.astype(jnp.float32), p['bf'].reshape(1, N_CLS))
    return out


def reference_forward(x, p):
    """Pure-JAX reference (eval-mode BN, identity dropout) for validation."""
    def bn(y, g, be, rm, rv):
        return g[None, :, None] * (y - rm[None, :, None]) / \
            jnp.sqrt(rv[None, :, None] + EPS) + be[None, :, None]

    y = lax.conv_general_dilated(x, p['w1'], window_strides=(S1,), padding='VALID',
                                 dimension_numbers=('NCH', 'OIH', 'NCH'))
    y = y + p['b1'][None, :, None]
    y = jnp.maximum(bn(y, p['g1'], p['be1'], p['rm1'], p['rv1']), 0.0)
    y = y.reshape(y.shape[0], C1, L_POOL1, P1_K).max(axis=-1)
    y = lax.conv_general_dilated(y, p['w2'], window_strides=(S2,), padding='VALID',
                                 dimension_numbers=('NCH', 'OIH', 'NCH'))
    y = y + p['b2'][None, :, None]
    y = jnp.maximum(bn(y, p['g2'], p['be2'], p['rm2'], p['rv2']), 0.0)
    y = y.reshape(y.shape[0], C2, L_POOL2, P2_K).max(axis=-1)
    y = y.reshape(y.shape[0], C2 * L_POOL2)
    return y @ p['wf'].T + p['bf'][None, :]


if __name__ == "__main__":
    key = jax.random.PRNGKey(0)
    ks = jax.random.split(key, 11)
    params = {
        'w1': 0.1 * jax.random.normal(ks[0], (C1, C_IN, K1), jnp.float32),
        'b1': 0.1 * jax.random.normal(ks[1], (C1,), jnp.float32),
        'g1': 1.0 + 0.1 * jax.random.normal(ks[2], (C1,), jnp.float32),
        'be1': 0.1 * jax.random.normal(ks[3], (C1,), jnp.float32),
        'rm1': jnp.zeros((C1,), jnp.float32),
        'rv1': jnp.ones((C1,), jnp.float32),
        'w2': 0.1 * jax.random.normal(ks[4], (C2, C1, K2), jnp.float32),
        'b2': 0.1 * jax.random.normal(ks[5], (C2,), jnp.float32),
        'g2': 1.0 + 0.1 * jax.random.normal(ks[6], (C2,), jnp.float32),
        'be2': 0.1 * jax.random.normal(ks[7], (C2,), jnp.float32),
        'rm2': jnp.zeros((C2,), jnp.float32),
        'rv2': jnp.ones((C2,), jnp.float32),
        'wf': 0.1 * jax.random.normal(ks[8], (N_CLS, C2 * L_POOL2), jnp.float32),
        'bf': 0.1 * jax.random.normal(ks[9], (N_CLS,), jnp.float32),
    }
    x = jax.random.normal(ks[10], (B, C_IN, L_IN), jnp.float32)

    out = jax.block_until_ready(conv_model_a_forward(x, params))
    ref = jax.block_until_ready(reference_forward(x, params))
    assert out.shape == (B, N_CLS)
    np.testing.assert_allclose(np.asarray(out), np.asarray(ref), rtol=1e-4, atol=1e-4)
    print("KERNEL_OK")
</pallas_src>

<mosaic_0001>
module attributes {stable_mosaic.version = 11 : i64} {
  func.func @convmodel_kernel(%arg0: memref<240x24xf32, #tpu.memory_space<vmem>>, %arg1: memref<24x16xf32, #tpu.memory_space<vmem>>, %arg2: memref<1x16xf32, #tpu.memory_space<vmem>>, %arg3: memref<1x16xf32, #tpu.memory_space<vmem>>, %arg4: memref<128x128xf32, #tpu.memory_space<vmem>>, %arg5: memref<1x128xf32, #tpu.memory_space<vmem>>, %arg6: memref<1x128xf32, #tpu.memory_space<vmem>>, %arg7: memref<256x5xf32, #tpu.memory_space<vmem>>, %arg8: memref<1x5xf32, #tpu.memory_space<vmem>>, %arg9: memref<2x5xf32, #tpu.memory_space<vmem>>) attributes {dimension_semantics = [], scalar_prefetch = 0 : i64, scratch_operands = 0 : i64, tpu.core_type = #tpu.core_type<tc>} {
    %c0 = arith.constant 0 : index
    %c0_0 = arith.constant 0 : index
    %0 = vector.load %arg0[%c0, %c0_0] : memref<240x24xf32, #tpu.memory_space<vmem>>, vector<240x24xf32>
    %c0_1 = arith.constant 0 : index
    %c0_2 = arith.constant 0 : index
    %1 = vector.load %arg1[%c0_1, %c0_2] : memref<24x16xf32, #tpu.memory_space<vmem>>, vector<24x16xf32>
    %cst = arith.constant dense<0.000000e+00> : vector<240x16xf32>
    %2 = tpu.matmul %0, %1, %cst {dimension_numbers = #tpu.dot_dimension_numbers<[1], [0], [0], [1], [0, 0, 1, 1], [], []>} : vector<240x24xf32>, vector<24x16xf32>, vector<240x16xf32> -> vector<240x16xf32>
    %c0_3 = arith.constant 0 : index
    %c0_4 = arith.constant 0 : index
    %3 = vector.load %arg2[%c0_3, %c0_4] : memref<1x16xf32, #tpu.memory_space<vmem>>, vector<1x16xf32>
    %4 = vector.broadcast %3 : vector<1x16xf32> to vector<240x16xf32>
    %5 = arith.mulf %2, %4 : vector<240x16xf32>
    %c0_5 = arith.constant 0 : index
    %c0_6 = arith.constant 0 : index
    %6 = vector.load %arg3[%c0_5, %c0_6] : memref<1x16xf32, #tpu.memory_space<vmem>>, vector<1x16xf32>
    %7 = vector.broadcast %6 : vector<1x16xf32> to vector<240x16xf32>
    %8 = arith.addf %5, %7 : vector<240x16xf32>
    %cst_7 = arith.constant 0.000000e+00 : f32
    %9 = vector.broadcast %cst_7 : f32 to vector<240x16xf32>
    %10 = arith.maximumf %8, %9 : vector<240x16xf32>
    %11 = vector.shape_cast %10 : vector<240x16xf32> to vector<2x15x8x16xf32>
    %cst_8 = arith.constant dense<0xFF800000> : vector<2x15x16xf32>
    %12 = vector.multi_reduction <maximumf>, %11, %cst_8 [2] : vector<2x15x8x16xf32> to vector<2x15x16xf32>
    %13 = vector.extract_strided_slice %12 {offsets = [0, 0, 0], sizes = [2, 8, 16], strides = [1, 1, 1]} : vector<2x15x16xf32> to vector<2x8x16xf32>
    %14 = vector.extract_strided_slice %12 {offsets = [0, 1, 0], sizes = [2, 8, 16], strides = [1, 1, 1]} : vector<2x15x16xf32> to vector<2x8x16xf32>
    %15 = vector.extract_strided_slice %12 {offsets = [0, 2, 0], sizes = [2, 8, 16], strides = [1, 1, 1]} : vector<2x15x16xf32> to vector<2x8x16xf32>
    %16 = vector.extract_strided_slice %12 {offsets = [0, 3, 0], sizes = [2, 8, 16], strides = [1, 1, 1]} : vector<2x15x16xf32> to vector<2x8x16xf32>
    %17 = vector.extract_strided_slice %12 {offsets = [0, 4, 0], sizes = [2, 8, 16], strides = [1, 1, 1]} : vector<2x15x16xf32> to vector<2x8x16xf32>
    %18 = vector.extract_strided_slice %12 {offsets = [0, 5, 0], sizes = [2, 8, 16], strides = [1, 1, 1]} : vector<2x15x16xf32> to vector<2x8x16xf32>
    %19 = vector.extract_strided_slice %12 {offsets = [0, 6, 0], sizes = [2, 8, 16], strides = [1, 1, 1]} : vector<2x15x16xf32> to vector<2x8x16xf32>
    %20 = vector.extract_strided_slice %12 {offsets = [0, 7, 0], sizes = [2, 8, 16], strides = [1, 1, 1]} : vector<2x15x16xf32> to vector<2x8x16xf32>
    %21 = tpu.concatenate %13, %14, %15, %16, %17, %18, %19, %20 in 2 : vector<2x8x16xf32>, vector<2x8x16xf32>, vector<2x8x16xf32>, vector<2x8x16xf32>, vector<2x8x16xf32>, vector<2x8x16xf32>, vector<2x8x16xf32>, vector<2x8x16xf32> -> vector<2x8x128xf32>
    %22 = vector.shape_cast %21 : vector<2x8x128xf32> to vector<16x128xf32>
    %c0_9 = arith.constant 0 : index
    %c0_10 = arith.constant 0 : index
    %23 = vector.load %arg4[%c0_9, %c0_10] : memref<128x128xf32, #tpu.memory_space<vmem>>, vector<128x128xf32>
    %cst_11 = arith.constant dense<0.000000e+00> : vector<16x128xf32>
    %24 = tpu.matmul %22, %23, %cst_11 {dimension_numbers = #tpu.dot_dimension_numbers<[1], [0], [0], [1], [0, 0, 1, 1], [], []>} : vector<16x128xf32>, vector<128x128xf32>, vector<16x128xf32> -> vector<16x128xf32>
    %c0_12 = arith.constant 0 : index
    %c0_13 = arith.constant 0 : index
    %25 = vector.load %arg5[%c0_12, %c0_13] : memref<1x128xf32, #tpu.memory_space<vmem>>, vector<1x128xf32>
    %26 = vector.broadcast %25 : vector<1x128xf32> to vector<16x128xf32>
    %27 = arith.mulf %24, %26 : vector<16x128xf32>
    %c0_14 = arith.constant 0 : index
    %c0_15 = arith.constant 0 : index
    %28 = vector.load %arg6[%c0_14, %c0_15] : memref<1x128xf32, #tpu.memory_space<vmem>>, vector<1x128xf32>
    %29 = vector.broadcast %28 : vector<1x128xf32> to vector<16x128xf32>
    %30 = arith.addf %27, %29 : vector<16x128xf32>
    %cst_16 = arith.constant 0.000000e+00 : f32
    %31 = vector.broadcast %cst_16 : f32 to vector<16x128xf32>
    %32 = arith.maximumf %30, %31 : vector<16x128xf32>
    %33 = vector.shape_cast %32 : vector<16x128xf32> to vector<2x2x4x128xf32>
    %cst_17 = arith.constant dense<0xFF800000> : vector<2x2x128xf32>
    %34 = vector.multi_reduction <maximumf>, %33, %cst_17 [2] : vector<2x2x4x128xf32> to vector<2x2x128xf32>
    %35 = vector.extract_strided_slice %34 {offsets = [0, 0, 0], sizes = [2, 1, 128], strides = [1, 1, 1]} : vector<2x2x128xf32> to vector<2x1x128xf32>
    %36 = vector.shape_cast %35 : vector<2x1x128xf32> to vector<2x128xf32>
    %37 = vector.extract_strided_slice %34 {offsets = [0, 1, 0], sizes = [2, 1, 128], strides = [1, 1, 1]} : vector<2x2x128xf32> to vector<2x1x128xf32>
    %38 = vector.shape_cast %37 : vector<2x1x128xf32> to vector<2x128xf32>
    %39 = tpu.concatenate %36, %38 in 1 : vector<2x128xf32>, vector<2x128xf32> -> vector<2x256xf32>
    %c0_18 = arith.constant 0 : index
    %c0_19 = arith.constant 0 : index
    %40 = vector.load %arg7[%c0_18, %c0_19] : memref<256x5xf32, #tpu.memory_space<vmem>>, vector<256x5xf32>
    %cst_20 = arith.constant dense<0.000000e+00> : vector<2x5xf32>
    %41 = tpu.matmul %39, %40, %cst_20 {dimension_numbers = #tpu.dot_dimension_numbers<[1], [0], [0], [1], [0, 0, 1, 1], [], []>} : vector<2x256xf32>, vector<256x5xf32>, vector<2x5xf32> -> vector<2x5xf32>
    %c0_21 = arith.constant 0 : index
    %c0_22 = arith.constant 0 : index
    %42 = vector.load %arg8[%c0_21, %c0_22] : memref<1x5xf32, #tpu.memory_space<vmem>>, vector<1x5xf32>
    %43 = vector.broadcast %42 : vector<1x5xf32> to vector<2x5xf32>
    %44 = arith.addf %41, %43 : vector<2x5xf32>
    %c0_23 = arith.constant 0 : index
    %c0_24 = arith.constant 0 : index
    %45 = vector.load %arg9[%c0_23, %c0_24] : memref<2x5xf32, #tpu.memory_space<vmem>>, vector<2x5xf32>
    tpu.vector_store %arg9[%c0_23, %c0_24], %44 {strides = array<i32>} : memref<2x5xf32, #tpu.memory_space<vmem>>, vector<2x5xf32>,
    return
  }
}

</mosaic_0001>

<llo_original>
// kernel: tpu_custom_call.1
$region0: #{tpu_custom_call.1}
  #allocation0 [shape = 'u32[]', space=smem, size = 0x4, offset = 0x4, fixed_abs, tag = 'smem constant byte address 0x4 - core index']
  #allocation1 [shape = 'u32[144,128]{1,0:T(1,128)}', space=vmem, size = 0x12000, scoped, tag = 'internal scratch']
  %s0 = inlined_call_operand.vmem [shape: f32[240,24], index: 0, kind: input, shape index: {}]
  %s1 = inlined_call_operand.vmem [shape: f32[24,16], index: 1, kind: input, shape index: {}]
  %s2 = inlined_call_operand.vmem [shape: f32[1,16], index: 2, kind: input, shape index: {}]
  %s3 = inlined_call_operand.vmem [shape: f32[1,16], index: 3, kind: input, shape index: {}]
  %s4 = inlined_call_operand.vmem [shape: f32[128,128], index: 4, kind: input, shape index: {}]
  %s5 = inlined_call_operand.vmem [shape: f32[1,128], index: 5, kind: input, shape index: {}]
  %s6 = inlined_call_operand.vmem [shape: f32[1,128], index: 6, kind: input, shape index: {}]
  %s7 = inlined_call_operand.vmem [shape: f32[256,5], index: 7, kind: input, shape index: {}]
  %s8 = inlined_call_operand.vmem [shape: f32[1,5], index: 8, kind: input, shape index: {}]
  %s9 = inlined_call_operand.hbm [shape: f32[2,5], index: 9, kind: output, shape index: {}]
  %s10 = sld [smem:[#allocation0]]
  $region46: #{tpu_custom_call.1} parent=0
    _
  %s12 = ssub.s32 1, %s10
  %s13 = scalar_select 0, %s12, %s10
  $region1: #{tpu_custom_call.1} parent=0
    #allocation2 [shape = 'u8[1024]{0}', space=vmem, size = 0x400, scoped, tag = 'output window, operand 0, single buffered']
    #allocation3 [shape = 's32[1]{0}', space=sflag, size = 0x4, scoped, tag = 'scoped memory for tpu_custom_call.1']
    %14 = vsyncpa [#allocation3], 0
    // Predicated region
    $region2: #{tpu_custom_call.1} parent=1 // pred_check
      _
    $region3: #{tpu_custom_call.1} parent=1 // pred_check_branch
      %16 = sbr.rel (0) target = $region5
    $region4: #{tpu_custom_call.1} parent=1 // pred_region
      _
    $region5: #{tpu_custom_call.1} parent=1 // pred_fallthru
      _
    // Predicated region
    $region6: #{tpu_custom_call.1} parent=1 // pred_check
      _
    $region7: #{tpu_custom_call.1} parent=1 // pred_check_branch
      %18 = sbr.rel (0) target = $region9
    $region8: #{tpu_custom_call.1} parent=1 // pred_region
      _
    $region9: #{tpu_custom_call.1} parent=1 // pred_fallthru
      _
    // Predicated region
    $region10: #{tpu_custom_call.1} parent=1 // pred_check
      _
    $region11: #{tpu_custom_call.1} parent=1 // pred_check_branch
      %20 = sbr.rel (0) target = $region13
    $region12: #{tpu_custom_call.1} parent=1 // pred_region
      _
    $region13: #{tpu_custom_call.1} parent=1 // pred_fallthru
      _
    // Predicated region
    $region14: #{tpu_custom_call.1} parent=1 // pred_check
      _
    $region15: #{tpu_custom_call.1} parent=1 // pred_check_branch
      %22 = sbr.rel (0) target = $region17
    $region16: #{tpu_custom_call.1} parent=1 // pred_region
      _
    $region17: #{tpu_custom_call.1} parent=1 // pred_fallthru
      _
    // Predicated region
    $region18: #{tpu_custom_call.1} parent=1 // pred_check
      _
    $region19: #{tpu_custom_call.1} parent=1 // pred_check_branch
      %24 = sbr.rel (0) target = $region21
    $region20: #{tpu_custom_call.1} parent=1 // pred_region
      _
    $region21: #{tpu_custom_call.1} parent=1 // pred_fallthru
      _
    // Predicated region
    $region22: #{tpu_custom_call.1} parent=1 // pred_check
      _
    $region23: #{tpu_custom_call.1} parent=1 // pred_check_branch
      %26 = sbr.rel (0) target = $region25
    $region24: #{tpu_custom_call.1} parent=1 // pred_region
      _
    $region25: #{tpu_custom_call.1} parent=1 // pred_fallthru
      _
    // Predicated region
    $region26: #{tpu_custom_call.1} parent=1 // pred_check
      _
    $region27: #{tpu_custom_call.1} parent=1 // pred_check_branch
      %28 = sbr.rel (0) target = $region29
    $region28: #{tpu_custom_call.1} parent=1 // pred_region
      _
    $region29: #{tpu_custom_call.1} parent=1 // pred_fallthru
      _
    // Predicated region
    $region30: #{tpu_custom_call.1} parent=1 // pred_check
      _
    $region31: #{tpu_custom_call.1} parent=1 // pred_check_branch
      %30 = sbr.rel (0) target = $region33
    $region32: #{tpu_custom_call.1} parent=1 // pred_region
      _
    $region33: #{tpu_custom_call.1} parent=1 // pred_fallthru
      _
    // Predicated region
    $region34: #{tpu_custom_call.1} parent=1 // pred_check
      _
    $region35: #{tpu_custom_call.1} parent=1 // pred_check_branch
      %32 = sbr.rel (0) target = $region37
    $region36: #{tpu_custom_call.1} parent=1 // pred_region
      _
    $region37: #{tpu_custom_call.1} parent=1 // pred_fallthru
      _
    %v33 = vld [vmem:[%s0] sm:$0xff]
    %v34 = vld [vmem:[%s0 + $0x8] sm:$0xff]
    %v35 = vld [vmem:[%s0 + $0x10] sm:$0xff]
    %v36 = vld [vmem:[%s0 + $0x18] sm:$0xff]
    %v37 = vld [vmem:[%s0 + $0x20] sm:$0xff]
    %v38 = vld [vmem:[%s0 + $0x28] sm:$0xff]
    %v39 = vld [vmem:[%s0 + $0x30] sm:$0xff]
    %v40 = vld [vmem:[%s0 + $0x38] sm:$0xff]
    %v41 = vld [vmem:[%s0 + $0x40] sm:$0xff]
    %v42 = vld [vmem:[%s0 + $0x48] sm:$0xff]
    %v43 = vld [vmem:[%s0 + $0x50] sm:$0xff]
    %v44 = vld [vmem:[%s0 + $0x58] sm:$0xff]
    %v45 = vld [vmem:[%s0 + $0x60] sm:$0xff]
    %v46 = vld [vmem:[%s0 + $0x68] sm:$0xff]
    %v47 = vld [vmem:[%s0 + $0x70] sm:$0xff]
    %v48 = vld [vmem:[%s0 + $0x78] sm:$0xff]
    %v49 = vld [vmem:[%s0 + $0x80] sm:$0xff]
    %v50 = vld [vmem:[%s0 + $0x88] sm:$0xff]
    %v51 = vld [vmem:[%s0 + $0x90] sm:$0xff]
    %v52 = vld [vmem:[%s0 + $0x98] sm:$0xff]
    %v53 = vld [vmem:[%s0 + $0xa0] sm:$0xff]
    %v54 = vld [vmem:[%s0 + $0xa8] sm:$0xff]
    %v55 = vld [vmem:[%s0 + $0xb0] sm:$0xff]
    %v56 = vld [vmem:[%s0 + $0xb8] sm:$0xff]
    %v57 = vld [vmem:[%s0 + $0xc0] sm:$0xff]
    %v58 = vld [vmem:[%s0 + $0xc8] sm:$0xff]
    %v59 = vld [vmem:[%s0 + $0xd0] sm:$0xff]
    %v60 = vld [vmem:[%s0 + $0xd8] sm:$0xff]
    %v61 = vld [vmem:[%s0 + $0xe0] sm:$0xff]
    %v62 = vld [vmem:[%s0 + $0xe8] sm:$0xff]
    %v63 = vld [vmem:[%s1] sm:$0xff]
    %v64 = vld [vmem:[%s1 + $0x8] sm:$0xff]
    %v65 = vld [vmem:[%s1 + $0x10] sm:$0xff]
    %vm66 = vcmask 195584
    %v68 = vsel %vm66, %v33, 0
    %v71 = vsel %vm66, %v34, 0
    %v74 = vsel %vm66, %v35, 0
    %v77 = vsel %vm66, %v36, 0
    %v80 = vsel %vm66, %v37, 0
    %v83 = vsel %vm66, %v38, 0
    %v86 = vsel %vm66, %v39, 0
    %v89 = vsel %vm66, %v40, 0
    %v92 = vsel %vm66, %v41, 0
    %v95 = vsel %vm66, %v42, 0
    %v98 = vsel %vm66, %v43, 0
    %v101 = vsel %vm66, %v44, 0
    %v104 = vsel %vm66, %v45, 0
    %v107 = vsel %vm66, %v46, 0
    %v110 = vsel %vm66, %v47, 0
    %v113 = vsel %vm66, %v48, 0
    %v116 = vsel %vm66, %v49, 0
    %v119 = vsel %vm66, %v50, 0
    %v122 = vsel %vm66, %v51, 0
    %v125 = vsel %vm66, %v52, 0
    %v128 = vsel %vm66, %v53, 0
    %v131 = vsel %vm66, %v54, 0
    %v134 = vsel %vm66, %v55, 0
    %v137 = vsel %vm66, %v56, 0
    %v140 = vsel %vm66, %v57, 0
    %v143 = vsel %vm66, %v58, 0
    %v146 = vsel %vm66, %v59, 0
    %v149 = vsel %vm66, %v60, 0
    %v152 = vsel %vm66, %v61, 0
    %v155 = vsel %vm66, %v62, 0
    %157 = vmatprep.subr.mxu0 0.0
    %158 = vmatpush1.msra.mxu0 %v63
    %159 = vmatprep.subr.mxu0 0.0
    %160 = vmatpush1.msra.mxu0 %v64
    %161 = vmatprep.subr.mxu0 0.0
    %162 = vmatpush1.msra.mxu0 %v65
    %163 = vmatprep.subr.mxu0 0.0
    %164 = vmatpush1.msra.mxu0 0.0
    %165 = vmatprep.subr.mxu0 0.0
    %166 = vmatpush1.msra.mxu0 0.0
    %167 = vmatprep.subr.mxu0 0.0
    %168 = vmatpush1.msra.mxu0 0.0
    %169 = vmatprep.subr.mxu0 0.0
    %170 = vmatpush1.msra.mxu0 0.0
    %171 = vmatprep.subr.mxu0 0.0
    %172 = vmatpush1.msra.mxu0 0.0
    %173 = vmatprep.subr.mxu0 0.0
    %174 = vmatpush1.msra.mxu0 0.0
    %175 = vmatprep.subr.mxu0 0.0
    %176 = vmatpush1.msra.mxu0 0.0
    %177 = vmatprep.subr.mxu0 0.0
    %178 = vmatpush1.msra.mxu0 0.0
    %179 = vmatprep.subr.mxu0 0.0
    %180 = vmatpush1.msra.mxu0 0.0
    %181 = vmatprep.subr.mxu0 0.0
    %182 = vmatpush1.msra.mxu0 0.0
    %183 = vmatprep.subr.mxu0 0.0
    %184 = vmatpush1.msra.mxu0 0.0
    %185 = vmatprep.subr.mxu0 0.0
    %186 = vmatpush1.msra.mxu0 0.0
    %187 = vmatprep.subr.mxu0 0.0
    %188 = vmatpush1.msra.mxu0 0.0
    %189 = vmatprep.subr.mxu0 0.0
    %190 = vmatpush1.msra.mxu0 0.0
    %191 = vmatprep.subr.mxu0 0.0
    %192 = vmatpush1.msra.mxu0 0.0
    %193 = vmatprep.subr.mxu0 0.0
    %194 = vmatpush1.msra.mxu0 0.0
    %195 = vmatprep.subr.mxu0 0.0
    %196 = vmatpush1.msra.mxu0 0.0
    %197 = vmatprep.subr.mxu0 0.0
    %198 = vmatpush1.msra.mxu0 0.0
    %199 = vmatprep.subr.mxu0 0.0
    %200 = vmatpush1.msra.mxu0 0.0
    %201 = vmatprep.subr.mxu0 0.0
    %202 = vmatpush1.msra.mxu0 0.0
    %203 = vmatprep.subr.mxu0 0.0
    %204 = vmatpush1.msra.mxu0 0.0
    %205 = vmatprep.subr.mxu0 0.0
    %206 = vmatpush1.msra.mxu0 0.0
    %207 = vmatprep.subr.mxu0 0.0
    %208 = vmatpush1.msra.mxu0 0.0
    %209 = vmatprep.subr.mxu0 0.0
    %210 = vmatpush1.msra.mxu0 0.0
    %211 = vmatprep.subr.mxu0 0.0
    %212 = vmatpush1.msra.mxu0 0.0
    %213 = vmatprep.subr.mxu0 0.0
    %214 = vmatpush1.msra.mxu0 0.0
    %215 = vmatprep.subr.mxu0 0.0
    %216 = vmatpush1.msra.mxu0 0.0
    %217 = vmatprep.subr.mxu0 0.0
    %218 = vmatpush1.msra.mxu0 0.0
    %219 = vmatprep.subr.mxu0 0.0
    %220 = vmatpush1.msra.mxu0 0.0
    %221 = vmatprep.mubr.f32.mxu0 0.0
    %222 = vmatmul.mubr.f32.gmra.mrb[0].mxu0 %v68
    %v223 = vpop.f32.mrb[0].mxu0
    %v224 = vadd.f32 0.0, %v223
    %v225 = vpop.f32.mrb[0].mxu0
    %226 = vmatprep.mubr.f32.mxu0 0.0
    %227 = vmatmul.mubr.f32.gmra.mrb[0].mxu0 %v71
    %v228 = vpop.f32.mrb[0].mxu0
    %v229 = vadd.f32 0.0, %v228
    %v230 = vpop.f32.mrb[0].mxu0
    %231 = vmatprep.mubr.f32.mxu0 0.0
    %232 = vmatmul.mubr.f32.gmra.mrb[0].mxu0 %v74
    %v233 = vpop.f32.mrb[0].mxu0
    %v234 = vadd.f32 0.0, %v233
    %v235 = vpop.f32.mrb[0].mxu0
    %236 = vmatprep.mubr.f32.mxu0 0.0
    %237 = vmatmul.mubr.f32.gmra.mrb[0].mxu0 %v77
    %v238 = vpop.f32.mrb[0].mxu0
    %v239 = vadd.f32 0.0, %v238
    %v240 = vpop.f32.mrb[0].mxu0
    %241 = vmatprep.mubr.f32.mxu0 0.0
    %242 = vmatmul.mubr.f32.gmra.mrb[0].mxu0 %v80
    %v243 = vpop.f32.mrb[0].mxu0
    %v244 = vadd.f32 0.0, %v243
    %v245 = vpop.f32.mrb[0].mxu0
    %246 = vmatprep.mubr.f32.mxu0 0.0
    %247 = vmatmul.mubr.f32.gmra.mrb[0].mxu0 %v83
    %v248 = vpop.f32.mrb[0].mxu0
    %v249 = vadd.f32 0.0, %v248
    %v250 = vpop.f32.mrb[0].mxu0
    %251 = vmatprep.mubr.f32.mxu0 0.0
    %252 = vmatmul.mubr.f32.gmra.mrb[0].mxu0 %v86
    %v253 = vpop.f32.mrb[0].mxu0
    %v254 = vadd.f32 0.0, %v253
    %v255 = vpop.f32.mrb[0].mxu0
    %256 = vmatprep.mubr.f32.mxu0 0.0
    %257 = vmatmul.mubr.f32.gmra.mrb[0].mxu0 %v89
    %v258 = vpop.f32.mrb[0].mxu0
    %v259 = vadd.f32 0.0, %v258
    %v260 = vpop.f32.mrb[0].mxu0
    %261 = vmatprep.mubr.f32.mxu0 0.0
    %262 = vmatmul.mubr.f32.gmra.mrb[0].mxu0 %v92
    %v263 = vpop.f32.mrb[0].mxu0
    %v264 = vadd.f32 0.0, %v263
    %v265 = vpop.f32.mrb[0].mxu0
    %266 = vmatprep.mubr.f32.mxu0 0.0
    %267 = vmatmul.mubr.f32.gmra.mrb[0].mxu0 %v95
    %v268 = vpop.f32.mrb[0].mxu0
    %v269 = vadd.f32 0.0, %v268
    %v270 = vpop.f32.mrb[0].mxu0
    %271 = vmatprep.mubr.f32.mxu0 0.0
    %272 = vmatmul.mubr.f32.gmra.mrb[0].mxu0 %v98
    %v273 = vpop.f32.mrb[0].mxu0
    %v274 = vadd.f32 0.0, %v273
    %v275 = vpop.f32.mrb[0].mxu0
    %276 = vmatprep.mubr.f32.mxu0 0.0
    %277 = vmatmul.mubr.f32.gmra.mrb[0].mxu0 %v101
    %v278 = vpop.f32.mrb[0].mxu0
    %v279 = vadd.f32 0.0, %v278
    %v280 = vpop.f32.mrb[0].mxu0
    %281 = vmatprep.mubr.f32.mxu0 0.0
    %282 = vmatmul.mubr.f32.gmra.mrb[0].mxu0 %v104
    %v283 = vpop.f32.mrb[0].mxu0
    %v284 = vadd.f32 0.0, %v283
    %v285 = vpop.f32.mrb[0].mxu0
    %286 = vmatprep.mubr.f32.mxu0 0.0
    %287 = vmatmul.mubr.f32.gmra.mrb[0].mxu0 %v107
    %v288 = vpop.f32.mrb[0].mxu0
    %v289 = vadd.f32 0.0, %v288
    %v290 = vpop.f32.mrb[0].mxu0
    %291 = vmatprep.mubr.f32.mxu0 0.0
    %292 = vmatmul.mubr.f32.gmra.mrb[0].mxu0 %v110
    %v293 = vpop.f32.mrb[0].mxu0
    %v294 = vadd.f32 0.0, %v293
    %v295 = vpop.f32.mrb[0].mxu0
    %296 = vmatprep.mubr.f32.mxu0 0.0
    %297 = vmatmul.mubr.f32.gmra.mrb[0].mxu0 %v113
    %v298 = vpop.f32.mrb[0].mxu0
    %v299 = vadd.f32 0.0, %v298
    %v300 = vpop.f32.mrb[0].mxu0
    %301 = vmatprep.mubr.f32.mxu0 0.0
    %302 = vmatmul.mubr.f32.gmra.mrb[0].mxu0 %v116
    %v303 = vpop.f32.mrb[0].mxu0
    %v304 = vadd.f32 0.0, %v303
    %v305 = vpop.f32.mrb[0].mxu0
    %306 = vmatprep.mubr.f32.mxu0 0.0
    %307 = vmatmul.mubr.f32.gmra.mrb[0].mxu0 %v119
    %v308 = vpop.f32.mrb[0].mxu0
    %v309 = vadd.f32 0.0, %v308
    %v310 = vpop.f32.mrb[0].mxu0
    %311 = vmatprep.mubr.f32.mxu0 0.0
    %312 = vmatmul.mubr.f32.gmra.mrb[0].mxu0 %v122
    %v313 = vpop.f32.mrb[0].mxu0
    %v314 = vadd.f32 0.0, %v313
    %v315 = vpop.f32.mrb[0].mxu0
    %316 = vmatprep.mubr.f32.mxu0 0.0
    %317 = vmatmul.mubr.f32.gmra.mrb[0].mxu0 %v125
    %v318 = vpop.f32.mrb[0].mxu0
    %v319 = vadd.f32 0.0, %v318
    %v320 = vpop.f32.mrb[0].mxu0
    %321 = vmatprep.mubr.f32.mxu0 0.0
    %322 = vmatmul.mubr.f32.gmra.mrb[0].mxu0 %v128
    %v323 = vpop.f32.mrb[0].mxu0
    %v324 = vadd.f32 0.0, %v323
    %v325 = vpop.f32.mrb[0].mxu0
    %326 = vmatprep.mubr.f32.mxu0 0.0
    %327 = vmatmul.mubr.f32.gmra.mrb[0].mxu0 %v131
    %v328 = vpop.f32.mrb[0].mxu0
    %v329 = vadd.f32 0.0, %v328
    %v330 = vpop.f32.mrb[0].mxu0
    %331 = vmatprep.mubr.f32.mxu0 0.0
    %332 = vmatmul.mubr.f32.gmra.mrb[0].mxu0 %v134
    %v333 = vpop.f32.mrb[0].mxu0
    %v334 = vadd.f32 0.0, %v333
    %v335 = vpop.f32.mrb[0].mxu0
    %336 = vmatprep.mubr.f32.mxu0 0.0
    %337 = vmatmul.mubr.f32.gmra.mrb[0].mxu0 %v137
    %v338 = vpop.f32.mrb[0].mxu0
    %v339 = vadd.f32 0.0, %v338
    %v340 = vpop.f32.mrb[0].mxu0
    %341 = vmatprep.mubr.f32.mxu0 0.0
    %342 = vmatmul.mubr.f32.gmra.mrb[0].mxu0 %v140
    %v343 = vpop.f32.mrb[0].mxu0
    %v344 = vadd.f32 0.0, %v343
    %v345 = vpop.f32.mrb[0].mxu0
    %346 = vmatprep.mubr.f32.mxu0 0.0
    %347 = vmatmul.mubr.f32.gmra.mrb[0].mxu0 %v143
    %v348 = vpop.f32.mrb[0].mxu0
    %v349 = vadd.f32 0.0, %v348
    %v350 = vpop.f32.mrb[0].mxu0
    %351 = vmatprep.mubr.f32.mxu0 0.0
    %352 = vmatmul.mubr.f32.gmra.mrb[0].mxu0 %v146
    %v353 = vpop.f32.mrb[0].mxu0
    %v354 = vadd.f32 0.0, %v353
    %v355 = vpop.f32.mrb[0].mxu0
    %356 = vmatprep.mubr.f32.mxu0 0.0
    %357 = vmatmul.mubr.f32.gmra.mrb[0].mxu0 %v149
    %v358 = vpop.f32.mrb[0].mxu0
    %v359 = vadd.f32 0.0, %v358
    %v360 = vpop.f32.mrb[0].mxu0
    %361 = vmatprep.mubr.f32.mxu0 0.0
    %362 = vmatmul.mubr.f32.gmra.mrb[0].mxu0 %v152
    %v363 = vpop.f32.mrb[0].mxu0
    %v364 = vadd.f32 0.0, %v363
    %v365 = vpop.f32.mrb[0].mxu0
    %366 = vmatprep.mubr.f32.mxu0 0.0
    %367 = vmatmul.mubr.f32.gmra.mrb[0].mxu0 %v155
    %v368 = vpop.f32.mrb[0].mxu0
    %v369 = vadd.f32 0.0, %v368
    %v370 = vpop.f32.mrb[0].mxu0
    %371 = vdwg.mxu0
    %v372 = vld [vmem:[%s2] sm:$0x1]
    %v374 = vlaneseq
    %v375 = vshrl.u32 %v374, 7
    %v376 = vsub.s32 0, %v375
    %v377 = vrot.slane %v372, %v376
    %v379 = vmul.f32 %v224, %v377
    %v380 = vmul.f32 %v229, %v377
    %v381 = vmul.f32 %v234, %v377
    %v382 = vmul.f32 %v239, %v377
    %v383 = vmul.f32 %v244, %v377
    %v384 = vmul.f32 %v249, %v377
    %v385 = vmul.f32 %v254, %v377
    %v386 = vmul.f32 %v259, %v377
    %v387 = vmul.f32 %v264, %v377
    %v388 = vmul.f32 %v269, %v377
    %v389 = vmul.f32 %v274, %v377
    %v390 = vmul.f32 %v279, %v377
    %v391 = vmul.f32 %v284, %v377
    %v392 = vmul.f32 %v289, %v377
    %v393 = vmul.f32 %v294, %v377
    %v394 = vmul.f32 %v299, %v377
    %v395 = vmul.f32 %v304, %v377
    %v396 = vmul.f32 %v309, %v377
    %v397 = vmul.f32 %v314, %v377
    %v398 = vmul.f32 %v319, %v377
    %v399 = vmul.f32 %v324, %v377
    %v400 = vmul.f32 %v329, %v377
    %v401 = vmul.f32 %v334, %v377
    %v402 = vmul.f32 %v339, %v377
    %v403 = vmul.f32 %v344, %v377
    %v404 = vmul.f32 %v349, %v377
    %v405 = vmul.f32 %v354, %v377
    %v406 = vmul.f32 %v359, %v377
    %v407 = vmul.f32 %v364, %v377
    %v408 = vmul.f32 %v369, %v377
    %v409 = vld [vmem:[%s3] sm:$0x1]
    %v411 = vlaneseq
    %v412 = vshrl.u32 %v411, 7
    %v413 = vsub.s32 0, %v412
    %v414 = vrot.slane %v409, %v413
    %v416 = vadd.f32 %v379, %v414
    %v417 = vadd.f32 %v380, %v414
    %v418 = vadd.f32 %v381, %v414
    %v419 = vadd.f32 %v382, %v414
    %v420 = vadd.f32 %v383, %v414
    %v421 = vadd.f32 %v384, %v414
    %v422 = vadd.f32 %v385, %v414
    %v423 = vadd.f32 %v386, %v414
    %v424 = vadd.f32 %v387, %v414
    %v425 = vadd.f32 %v388, %v414
    %v426 = vadd.f32 %v389, %v414
    %v427 = vadd.f32 %v390, %v414
    %v428 = vadd.f32 %v391, %v414
    %v429 = vadd.f32 %v392, %v414
    %v430 = vadd.f32 %v393, %v414
    %v431 = vadd.f32 %v394, %v414
    %v432 = vadd.f32 %v395, %v414
    %v433 = vadd.f32 %v396, %v414
    %v434 = vadd.f32 %v397, %v414
    %v435 = vadd.f32 %v398, %v414
    %v436 = vadd.f32 %v399, %v414
    %v437 = vadd.f32 %v400, %v414
    %v438 = vadd.f32 %v401, %v414
    %v439 = vadd.f32 %v402, %v414
    %v440 = vadd.f32 %v403, %v414
    %v441 = vadd.f32 %v404, %v414
    %v442 = vadd.f32 %v405, %v414
    %v443 = vadd.f32 %v406, %v414
    %v444 = vadd.f32 %v407, %v414
    %v445 = vadd.f32 %v408, %v414
    %v446 = vmax.f32 %v416, 0.0
    %v447 = vmax.f32 %v417, 0.0
    %v448 = vmax.f32 %v418, 0.0
    %v449 = vmax.f32 %v419, 0.0
    %v450 = vmax.f32 %v420, 0.0
    %v451 = vmax.f32 %v421, 0.0
    %v452 = vmax.f32 %v422, 0.0
    %v453 = vmax.f32 %v423, 0.0
    %v454 = vmax.f32 %v424, 0.0
    %v455 = vmax.f32 %v425, 0.0
    %v456 = vmax.f32 %v426, 0.0
    %v457 = vmax.f32 %v427, 0.0
    %v458 = vmax.f32 %v428, 0.0
    %v459 = vmax.f32 %v429, 0.0
    %v460 = vmax.f32 %v430, 0.0
    %v461 = vmax.f32 %v431, 0.0
    %v462 = vmax.f32 %v432, 0.0
    %v463 = vmax.f32 %v433, 0.0
    %v464 = vmax.f32 %v434, 0.0
    %v465 = vmax.f32 %v435, 0.0
    %v466 = vmax.f32 %v436, 0.0
    %v467 = vmax.f32 %v437, 0.0
    %v468 = vmax.f32 %v438, 0.0
    %v469 = vmax.f32 %v439, 0.0
    %v470 = vmax.f32 %v440, 0.0
    %v471 = vmax.f32 %v441, 0.0
    %v472 = vmax.f32 %v442, 0.0
    %v473 = vmax.f32 %v443, 0.0
    %v474 = vmax.f32 %v444, 0.0
    %v475 = vmax.f32 %v445, 0.0
    %vm476 = vcmask 130048
    %v477 = vsel %vm476, %v446, -inf
    %v478 = vrot.slane %v477, 4
    %v479 = vmax.f32 %v477, %v478
    %v480 = vrot.slane %v479, 2
    %v481 = vmax.f32 %v479, %v480
    %v482 = vrot.slane %v481, 1
    %v483 = vmax.f32 %v481, %v482
    %v484 = vsel %vm476, %v447, -inf
    %v485 = vrot.slane %v484, 4
    %v486 = vmax.f32 %v484, %v485
    %v487 = vrot.slane %v486, 2
    %v488 = vmax.f32 %v486, %v487
    %v489 = vrot.slane %v488, 1
    %v490 = vmax.f32 %v488, %v489
    %v491 = vsel %vm476, %v448, -inf
    %v492 = vrot.slane %v491, 4
    %v493 = vmax.f32 %v491, %v492
    %v494 = vrot.slane %v493, 2
    %v495 = vmax.f32 %v493, %v494
    %v496 = vrot.slane %v495, 1
    %v497 = vmax.f32 %v495, %v496
    %v498 = vsel %vm476, %v449, -inf
    %v499 = vrot.slane %v498, 4
    %v500 = vmax.f32 %v498, %v499
    %v501 = vrot.slane %v500, 2
    %v502 = vmax.f32 %v500, %v501
    %v503 = vrot.slane %v502, 1
    %v504 = vmax.f32 %v502, %v503
    %v505 = vsel %vm476, %v450, -inf
    %v506 = vrot.slane %v505, 4
    %v507 = vmax.f32 %v505, %v506
    %v508 = vrot.slane %v507, 2
    %v509 = vmax.f32 %v507, %v508
    %v510 = vrot.slane %v509, 1
    %v511 = vmax.f32 %v509, %v510
    %v512 = vsel %vm476, %v451, -inf
    %v513 = vrot.slane %v512, 4
    %v514 = vmax.f32 %v512, %v513
    %v515 = vrot.slane %v514, 2
    %v516 = vmax.f32 %v514, %v515
    %v517 = vrot.slane %v516, 1
    %v518 = vmax.f32 %v516, %v517
    %v519 = vsel %vm476, %v452, -inf
    %v520 = vrot.slane %v519, 4
    %v521 = vmax.f32 %v519, %v520
    %v522 = vrot.slane %v521, 2
    %v523 = vmax.f32 %v521, %v522
    %v524 = vrot.slane %v523, 1
    %v525 = vmax.f32 %v523, %v524
    %v526 = vsel %vm476, %v453, -inf
    %v527 = vrot.slane %v526, 4
    %v528 = vmax.f32 %v526, %v527
    %v529 = vrot.slane %v528, 2
    %v530 = vmax.f32 %v528, %v529
    %v531 = vrot.slane %v530, 1
    %v532 = vmax.f32 %v530, %v531
    %v533 = vsel %vm476, %v454, -inf
    %v534 = vrot.slane %v533, 4
    %v535 = vmax.f32 %v533, %v534
    %v536 = vrot.slane %v535, 2
    %v537 = vmax.f32 %v535, %v536
    %v538 = vrot.slane %v537, 1
    %v539 = vmax.f32 %v537, %v538
    %v540 = vsel %vm476, %v455, -inf
    %v541 = vrot.slane %v540, 4
    %v542 = vmax.f32 %v540, %v541
    %v543 = vrot.slane %v542, 2
    %v544 = vmax.f32 %v542, %v543
    %v545 = vrot.slane %v544, 1
    %v546 = vmax.f32 %v544, %v545
    %v547 = vsel %vm476, %v456, -inf
    %v548 = vrot.slane %v547, 4
    %v549 = vmax.f32 %v547, %v548
    %v550 = vrot.slane %v549, 2
    %v551 = vmax.f32 %v549, %v550
    %v552 = vrot.slane %v551, 1
    %v553 = vmax.f32 %v551, %v552
    %v554 = vsel %vm476, %v457, -inf
    %v555 = vrot.slane %v554, 4
    %v556 = vmax.f32 %v554, %v555
    %v557 = vrot.slane %v556, 2
    %v558 = vmax.f32 %v556, %v557
    %v559 = vrot.slane %v558, 1
    %v560 = vmax.f32 %v558, %v559
    %v561 = vsel %vm476, %v458, -inf
    %v562 = vrot.slane %v561, 4
    %v563 = vmax.f32 %v561, %v562
    %v564 = vrot.slane %v563, 2
    %v565 = vmax.f32 %v563, %v564
    %v566 = vrot.slane %v565, 1
    %v567 = vmax.f32 %v565, %v566
    %v568 = vsel %vm476, %v459, -inf
    %v569 = vrot.slane %v568, 4
    %v570 = vmax.f32 %v568, %v569
    %v571 = vrot.slane %v570, 2
    %v572 = vmax.f32 %v570, %v571
    %v573 = vrot.slane %v572, 1
    %v574 = vmax.f32 %v572, %v573
    %v575 = vsel %vm476, %v460, -inf
    %v576 = vrot.slane %v575, 4
    %v577 = vmax.f32 %v575, %v576
    %v578 = vrot.slane %v577, 2
    %v579 = vmax.f32 %v577, %v578
    %v580 = vrot.slane %v579, 1
    %v581 = vmax.f32 %v579, %v580
    %v582 = vsel %vm476, %v461, -inf
    %v583 = vrot.slane %v582, 4
    %v584 = vmax.f32 %v582, %v583
    %v585 = vrot.slane %v584, 2
    %v586 = vmax.f32 %v584, %v585
    %v587 = vrot.slane %v586, 1
    %v588 = vmax.f32 %v586, %v587
    %v589 = vsel %vm476, %v462, -inf
    %v590 = vrot.slane %v589, 4
    %v591 = vmax.f32 %v589, %v590
    %v592 = vrot.slane %v591, 2
    %v593 = vmax.f32 %v591, %v592
    %v594 = vrot.slane %v593, 1
    %v595 = vmax.f32 %v593, %v594
    %v596 = vsel %vm476, %v463, -inf
    %v597 = vrot.slane %v596, 4
    %v598 = vmax.f32 %v596, %v597
    %v599 = vrot.slane %v598, 2
    %v600 = vmax.f32 %v598, %v599
    %v601 = vrot.slane %v600, 1
    %v602 = vmax.f32 %v600, %v601
    %v603 = vsel %vm476, %v464, -inf
    %v604 = vrot.slane %v603, 4
    %v605 = vmax.f32 %v603, %v604
    %v606 = vrot.slane %v605, 2
    %v607 = vmax.f32 %v605, %v606
    %v608 = vrot.slane %v607, 1
    %v609 = vmax.f32 %v607, %v608
    %v610 = vsel %vm476, %v465, -inf
    %v611 = vrot.slane %v610, 4
    %v612 = vmax.f32 %v610, %v611
    %v613 = vrot.slane %v612, 2
    %v614 = vmax.f32 %v612, %v613
    %v615 = vrot.slane %v614, 1
    %v616 = vmax.f32 %v614, %v615
    %v617 = vsel %vm476, %v466, -inf
    %v618 = vrot.slane %v617, 4
    %v619 = vmax.f32 %v617, %v618
    %v620 = vrot.slane %v619, 2
    %v621 = vmax.f32 %v619, %v620
    %v622 = vrot.slane %v621, 1
    %v623 = vmax.f32 %v621, %v622
    %v624 = vsel %vm476, %v467, -inf
    %v625 = vrot.slane %v624, 4
    %v626 = vmax.f32 %v624, %v625
    %v627 = vrot.slane %v626, 2
    %v628 = vmax.f32 %v626, %v627
    %v629 = vrot.slane %v628, 1
    %v630 = vmax.f32 %v628, %v629
    %v631 = vsel %vm476, %v468, -inf
    %v632 = vrot.slane %v631, 4
    %v633 = vmax.f32 %v631, %v632
    %v634 = vrot.slane %v633, 2
    %v635 = vmax.f32 %v633, %v634
    %v636 = vrot.slane %v635, 1
    %v637 = vmax.f32 %v635, %v636
    %v638 = vsel %vm476, %v469, -inf
    %v639 = vrot.slane %v638, 4
    %v640 = vmax.f32 %v638, %v639
    %v641 = vrot.slane %v640, 2
    %v642 = vmax.f32 %v640, %v641
    %v643 = vrot.slane %v642, 1
    %v644 = vmax.f32 %v642, %v643
    %v645 = vsel %vm476, %v470, -inf
    %v646 = vrot.slane %v645, 4
    %v647 = vmax.f32 %v645, %v646
    %v648 = vrot.slane %v647, 2
    %v649 = vmax.f32 %v647, %v648
    %v650 = vrot.slane %v649, 1
    %v651 = vmax.f32 %v649, %v650
    %v652 = vsel %vm476, %v471, -inf
    %v653 = vrot.slane %v652, 4
    %v654 = vmax.f32 %v652, %v653
    %v655 = vrot.slane %v654, 2
    %v656 = vmax.f32 %v654, %v655
    %v657 = vrot.slane %v656, 1
    %v658 = vmax.f32 %v656, %v657
    %v659 = vsel %vm476, %v472, -inf
    %v660 = vrot.slane %v659, 4
    %v661 = vmax.f32 %v659, %v660
    %v662 = vrot.slane %v661, 2
    %v663 = vmax.f32 %v661, %v662
    %v664 = vrot.slane %v663, 1
    %v665 = vmax.f32 %v663, %v664
    %v666 = vsel %vm476, %v473, -inf
    %v667 = vrot.slane %v666, 4
    %v668 = vmax.f32 %v666, %v667
    %v669 = vrot.slane %v668, 2
    %v670 = vmax.f32 %v668, %v669
    %v671 = vrot.slane %v670, 1
    %v672 = vmax.f32 %v670, %v671
    %v673 = vsel %vm476, %v474, -inf
    %v674 = vrot.slane %v673, 4
    %v675 = vmax.f32 %v673, %v674
    %v676 = vrot.slane %v675, 2
    %v677 = vmax.f32 %v675, %v676
    %v678 = vrot.slane %v677, 1
    %v679 = vmax.f32 %v677, %v678
    %v680 = vsel %vm476, %v475, -inf
    %v681 = vrot.slane %v680, 4
    %v682 = vmax.f32 %v680, %v681
    %v683 = vrot.slane %v682, 2
    %v684 = vmax.f32 %v682, %v683
    %v685 = vrot.slane %v684, 1
    %v686 = vmax.f32 %v684, %v685
    %vm703 = vcmask 1041409
    %v704 = vsel %vm703, %v490, %v483
    %vm705 = vcmask 1042434
    %v706 = vsel %vm705, %v497, %v704
    %vm707 = vcmask 1043459
    %v708 = vsel %vm707, %v504, %v706
    %vm709 = vcmask 1044484
    %v710 = vsel %vm709, %v511, %v708
    %vm711 = vcmask 1045509
    %v712 = vsel %vm711, %v518, %v710
    %vm713 = vcmask 1046534
    %v714 = vsel %vm713, %v525, %v712
    %vm715 = vcmask 1047559
    %v716 = vsel %vm715, %v532, %v714
    %v717 = vsel %vm703, %v595, %v588
    %v718 = vsel %vm705, %v602, %v717
    %v719 = vsel %vm707, %v609, %v718
    %v720 = vsel %vm709, %v616, %v719
    %v721 = vsel %vm711, %v623, %v720
    %v722 = vsel %vm713, %v630, %v721
    %v723 = vsel %vm715, %v637, %v722
    %v728 = vsel %vm703, %v497, %v490
    %v729 = vsel %vm705, %v504, %v728
    %v730 = vsel %vm707, %v511, %v729
    %v731 = vsel %vm709, %v518, %v730
    %v732 = vsel %vm711, %v525, %v731
    %v733 = vsel %vm713, %v532, %v732
    %v734 = vsel %vm715, %v539, %v733
    %v735 = vsel %vm703, %v602, %v595
    %v736 = vsel %vm705, %v609, %v735
    %v737 = vsel %vm707, %v616, %v736
    %v738 = vsel %vm709, %v623, %v737
    %v739 = vsel %vm711, %v630, %v738
    %v740 = vsel %vm713, %v637, %v739
    %v741 = vsel %vm715, %v644, %v740
    %742 = vrot.lane.b32.xlu0 %v734, 16
    %v743 = vpop.permute.xlu0 %742
    %744 = vrot.lane.b32.xlu0 %v741, 16
    %v745 = vpop.permute.xlu0 %744
    %v750 = vsel %vm703, %v504, %v497
    %v751 = vsel %vm705, %v511, %v750
    %v752 = vsel %vm707, %v518, %v751
    %v753 = vsel %vm709, %v525, %v752
    %v754 = vsel %vm711, %v532, %v753
    %v755 = vsel %vm713, %v539, %v754
    %v756 = vsel %vm715, %v546, %v755
    %v757 = vsel %vm703, %v609, %v602
    %v758 = vsel %vm705, %v616, %v757
    %v759 = vsel %vm707, %v623, %v758
    %v760 = vsel %vm709, %v630, %v759
    %v761 = vsel %vm711, %v637, %v760
    %v762 = vsel %vm713, %v644, %v761
    %v763 = vsel %vm715, %v651, %v762
    %764 = vrot.lane.b32.xlu0 %v756, 32
    %v765 = vpop.permute.xlu0 %764
    %766 = vrot.lane.b32.xlu0 %v763, 32
    %v767 = vpop.permute.xlu0 %766
    %v772 = vsel %vm703, %v511, %v504
    %v773 = vsel %vm705, %v518, %v772
    %v774 = vsel %vm707, %v525, %v773
    %v775 = vsel %vm709, %v532, %v774
    %v776 = vsel %vm711, %v539, %v775
    %v777 = vsel %vm713, %v546, %v776
    %v778 = vsel %vm715, %v553, %v777
    %v779 = vsel %vm703, %v616, %v609
    %v780 = vsel %vm705, %v623, %v779
    %v781 = vsel %vm707, %v630, %v780
    %v782 = vsel %vm709, %v637, %v781
    %v783 = vsel %vm711, %v644, %v782
    %v784 = vsel %vm713, %v651, %v783
    %v785 = vsel %vm715, %v658, %v784
    %786 = vrot.lane.b32.xlu0 %v778, 48
    %v787 = vpop.permute.xlu0 %786
    %788 = vrot.lane.b32.xlu0 %v785, 48
    %v789 = vpop.permute.xlu0 %788
    %v794 = vsel %vm703, %v518, %v511
    %v795 = vsel %vm705, %v525, %v794
    %v796 = vsel %vm707, %v532, %v795
    %v797 = vsel %vm709, %v539, %v796
    %v798 = vsel %vm711, %v546, %v797
    %v799 = vsel %vm713, %v553, %v798
    %v800 = vsel %vm715, %v560, %v799
    %v801 = vsel %vm703, %v623, %v616
    %v802 = vsel %vm705, %v630, %v801
    %v803 = vsel %vm707, %v637, %v802
    %v804 = vsel %vm709, %v644, %v803
    %v805 = vsel %vm711, %v651, %v804
    %v806 = vsel %vm713, %v658, %v805
    %v807 = vsel %vm715, %v665, %v806
    %808 = vrot.lane.b32.xlu0 %v800, 64
    %v809 = vpop.permute.xlu0 %808
    %810 = vrot.lane.b32.xlu0 %v807, 64
    %v811 = vpop.permute.xlu0 %810
    %v816 = vsel %vm703, %v525, %v518
    %v817 = vsel %vm705, %v532, %v816
    %v818 = vsel %vm707, %v539, %v817
    %v819 = vsel %vm709, %v546, %v818
    %v820 = vsel %vm711, %v553, %v819
    %v821 = vsel %vm713, %v560, %v820
    %v822 = vsel %vm715, %v567, %v821
    %v823 = vsel %vm703, %v630, %v623
    %v824 = vsel %vm705, %v637, %v823
    %v825 = vsel %vm707, %v644, %v824
    %v826 = vsel %vm709, %v651, %v825
    %v827 = vsel %vm711, %v658, %v826
    %v828 = vsel %vm713, %v665, %v827
    %v829 = vsel %vm715, %v672, %v828
    %830 = vrot.lane.b32.xlu0 %v822, 80
    %v831 = vpop.permute.xlu0 %830
    %832 = vrot.lane.b32.xlu0 %v829, 80
    %v833 = vpop.permute.xlu0 %832
    %v838 = vsel %vm703, %v532, %v525
    %v839 = vsel %vm705, %v539, %v838
    %v840 = vsel %vm707, %v546, %v839
    %v841 = vsel %vm709, %v553, %v840
    %v842 = vsel %vm711, %v560, %v841
    %v843 = vsel %vm713, %v567, %v842
    %v844 = vsel %vm715, %v574, %v843
    %v845 = vsel %vm703, %v637, %v630
    %v846 = vsel %vm705, %v644, %v845
    %v847 = vsel %vm707, %v651, %v846
    %v848 = vsel %vm709, %v658, %v847
    %v849 = vsel %vm711, %v665, %v848
    %v850 = vsel %vm713, %v672, %v849
    %v851 = vsel %vm715, %v679, %v850
    %852 = vrot.lane.b32.xlu0 %v844, 96
    %v853 = vpop.permute.xlu0 %852
    %854 = vrot.lane.b32.xlu0 %v851, 96
    %v855 = vpop.permute.xlu0 %854
    %v860 = vsel %vm703, %v539, %v532
    %v861 = vsel %vm705, %v546, %v860
    %v862 = vsel %vm707, %v553, %v861
    %v863 = vsel %vm709, %v560, %v862
    %v864 = vsel %vm711, %v567, %v863
    %v865 = vsel %vm713, %v574, %v864
    %v866 = vsel %vm715, %v581, %v865
    %v867 = vsel %vm703, %v644, %v637
    %v868 = vsel %vm705, %v651, %v867
    %v869 = vsel %vm707, %v658, %v868
    %v870 = vsel %vm709, %v665, %v869
    %v871 = vsel %vm711, %v672, %v870
    %v872 = vsel %vm713, %v679, %v871
    %v873 = vsel %vm715, %v686, %v872
    %874 = vrot.lane.b32.xlu0 %v866, 112
    %v875 = vpop.permute.xlu0 %874
    %876 = vrot.lane.b32.xlu0 %v873, 112
    %v877 = vpop.permute.xlu0 %876
    %v880 = vsel %vm476, %v716, %v743
    %v881 = vsel %vm476, %v723, %v745
    %vm882 = vcmask 261120
    %v883 = vsel %vm882, %v880, %v765
    %v884 = vsel %vm882, %v881, %v767
    %vm885 = vcmask 392192
    %v886 = vsel %vm885, %v883, %v787
    %v887 = vsel %vm885, %v884, %v789
    %vm888 = vcmask 523264
    %v889 = vsel %vm888, %v886, %v809
    %v890 = vsel %vm888, %v887, %v811
    %vm891 = vcmask 654336
    %v892 = vsel %vm891, %v889, %v831
    %v893 = vsel %vm891, %v890, %v833
    %vm894 = vcmask 785408
    %v895 = vsel %vm894, %v892, %v853
    %v896 = vsel %vm894, %v893, %v855
    %vm897 = vcmask 916480
    %v898 = vsel %vm897, %v895, %v875
    %v899 = vsel %vm897, %v896, %v877
    %v900 = vld [vmem:[%s4] sm:$0xff]
    %v901 = vld [vmem:[%s4 + $0x8] sm:$0xff]
    %v902 = vld [vmem:[%s4 + $0x10] sm:$0xff]
    %v903 = vld [vmem:[%s4 + $0x18] sm:$0xff]
    %v904 = vld [vmem:[%s4 + $0x20] sm:$0xff]
    %v905 = vld [vmem:[%s4 + $0x28] sm:$0xff]
    %v906 = vld [vmem:[%s4 + $0x30] sm:$0xff]
    %v907 = vld [vmem:[%s4 + $0x38] sm:$0xff]
    %v908 = vld [vmem:[%s4 + $0x40] sm:$0xff]
    %v909 = vld [vmem:[%s4 + $0x48] sm:$0xff]
    %v910 = vld [vmem:[%s4 + $0x50] sm:$0xff]
    %v911 = vld [vmem:[%s4 + $0x58] sm:$0xff]
    %v912 = vld [vmem:[%s4 + $0x60] sm:$0xff]
    %v913 = vld [vmem:[%s4 + $0x68] sm:$0xff]
    %v914 = vld [vmem:[%s4 + $0x70] sm:$0xff]
    %v915 = vld [vmem:[%s4 + $0x78] sm:$0xff]
    %916 = vmatprep.subr.mxu0 0.0
    %917 = vmatpush1.msra.mxu0 %v900
    %918 = vmatprep.subr.mxu0 0.0
    %919 = vmatpush1.msra.mxu0 %v901
    %920 = vmatprep.subr.mxu0 0.0
    %921 = vmatpush1.msra.mxu0 %v902
    %922 = vmatprep.subr.mxu0 0.0
    %923 = vmatpush1.msra.mxu0 %v903
    %924 = vmatprep.subr.mxu0 0.0
    %925 = vmatpush1.msra.mxu0 %v904
    %926 = vmatprep.subr.mxu0 0.0
    %927 = vmatpush1.msra.mxu0 %v905
    %928 = vmatprep.subr.mxu0 0.0
    %929 = vmatpush1.msra.mxu0 %v906
    %930 = vmatprep.subr.mxu0 0.0
    %931 = vmatpush1.msra.mxu0 %v907
    %932 = vmatprep.subr.mxu0 0.0
    %933 = vmatpush1.msra.mxu0 %v908
    %934 = vmatprep.subr.mxu0 0.0
    %935 = vmatpush1.msra.mxu0 %v909
    %936 = vmatprep.subr.mxu0 0.0
    %937 = vmatpush1.msra.mxu0 %v910
    %938 = vmatprep.subr.mxu0 0.0
    %939 = vmatpush1.msra.mxu0 %v911
    %940 = vmatprep.subr.mxu0 0.0
    %941 = vmatpush1.msra.mxu0 %v912
    %942 = vmatprep.subr.mxu0 0.0
    %943 = vmatpush1.msra.mxu0 %v913
    %944 = vmatprep.subr.mxu0 0.0
    %945 = vmatpush1.msra.mxu0 %v914
    %946 = vmatprep.subr.mxu0 0.0
    %947 = vmatpush1.msra.mxu0 %v915
    %948 = vmatprep.subr.mxu0 0.0
    %949 = vmatpush1.msra.mxu0 0.0
    %950 = vmatprep.subr.mxu0 0.0
    %951 = vmatpush1.msra.mxu0 0.0
    %952 = vmatprep.subr.mxu0 0.0
    %953 = vmatpush1.msra.mxu0 0.0
    %954 = vmatprep.subr.mxu0 0.0
    %955 = vmatpush1.msra.mxu0 0.0
    %956 = vmatprep.subr.mxu0 0.0
    %957 = vmatpush1.msra.mxu0 0.0
    %958 = vmatprep.subr.mxu0 0.0
    %959 = vmatpush1.msra.mxu0 0.0
    %960 = vmatprep.subr.mxu0 0.0
    %961 = vmatpush1.msra.mxu0 0.0
    %962 = vmatprep.subr.mxu0 0.0
    %963 = vmatpush1.msra.mxu0 0.0
    %964 = vmatprep.subr.mxu0 0.0
    %965 = vmatpush1.msra.mxu0 0.0
    %966 = vmatprep.subr.mxu0 0.0
    %967 = vmatpush1.msra.mxu0 0.0
    %968 = vmatprep.subr.mxu0 0.0
    %969 = vmatpush1.msra.mxu0 0.0
    %970 = vmatprep.subr.mxu0 0.0
    %971 = vmatpush1.msra.mxu0 0.0
    %972 = vmatprep.subr.mxu0 0.0
    %973 = vmatpush1.msra.mxu0 0.0
    %974 = vmatprep.subr.mxu0 0.0
    %975 = vmatpush1.msra.mxu0 0.0
    %976 = vmatprep.subr.mxu0 0.0
    %977 = vmatpush1.msra.mxu0 0.0
    %978 = vmatprep.subr.mxu0 0.0
    %979 = vmatpush1.msra.mxu0 0.0
    %980 = vmatprep.mubr.f32.mxu0 0.0
    %981 = vmatmul.mubr.f32.gmra.mrb[0].mxu0 %v898
    %v982 = vpop.f32.mrb[0].mxu0
    %v983 = vadd.f32 0.0, %v982
    %v984 = vpop.f32.mrb[0].mxu0
    %985 = vmatprep.mubr.f32.mxu0 0.0
    %986 = vmatmul.mubr.f32.gmra.mrb[0].mxu0 %v899
    %v987 = vpop.f32.mrb[0].mxu0
    %v988 = vadd.f32 0.0, %v987
    %v989 = vpop.f32.mrb[0].mxu0
    %990 = vdwg.mxu0
    %v991 = vld [vmem:[%s5] sm:$0x1]
    %v993 = vlaneseq
    %v994 = vshrl.u32 %v993, 7
    %v995 = vsub.s32 0, %v994
    %v996 = vrot.slane %v991, %v995
    %v998 = vmul.f32 %v983, %v996
    %v999 = vmul.f32 %v988, %v996
    %v1000 = vld [vmem:[%s6] sm:$0x1]
    %v1002 = vlaneseq
    %v1003 = vshrl.u32 %v1002, 7
    %v1004 = vsub.s32 0, %v1003
    %v1005 = vrot.slane %v1000, %v1004
    %v1007 = vadd.f32 %v998, %v1005
    %v1008 = vadd.f32 %v999, %v1005
    %v1009 = vmax.f32 %v1007, 0.0
    %v1010 = vmax.f32 %v1008, 0.0
    %v1013 = vcombine.high %v1009, %v1009
    %v1014 = vcombine.high %v1010, %v1010
    %vm1017 = vcmask 1043456
    %v1018 = vsel %vm1017, %v1009, -inf
    %v1019 = vrot.slane %v1018, 4
    %v1020 = vmax.f32 %v1018, %v1019
    %v1021 = vrot.slane %v1020, 2
    %v1022 = vmax.f32 %v1020, %v1021
    %v1023 = vrot.slane %v1022, 1
    %v1024 = vmax.f32 %v1022, %v1023
    %v1025 = vsel %vm1017, %v1013, -inf
    %v1026 = vrot.slane %v1025, 4
    %v1027 = vmax.f32 %v1025, %v1026
    %v1028 = vrot.slane %v1027, 2
    %v1029 = vmax.f32 %v1027, %v1028
    %v1030 = vrot.slane %v1029, 1
    %v1031 = vmax.f32 %v1029, %v1030
    %v1032 = vsel %vm1017, %v1010, -inf
    %v1033 = vrot.slane %v1032, 4
    %v1034 = vmax.f32 %v1032, %v1033
    %v1035 = vrot.slane %v1034, 2
    %v1036 = vmax.f32 %v1034, %v1035
    %v1037 = vrot.slane %v1036, 1
    %v1038 = vmax.f32 %v1036, %v1037
    %v1039 = vsel %vm1017, %v1014, -inf
    %v1040 = vrot.slane %v1039, 4
    %v1041 = vmax.f32 %v1039, %v1040
    %v1042 = vrot.slane %v1041, 2
    %v1043 = vmax.f32 %v1041, %v1042
    %v1044 = vrot.slane %v1043, 1
    %v1045 = vmax.f32 %v1043, %v1044
    %v1048 = vsel %vm703, %v1038, %v1024
    %v1052 = vsel %vm703, %v1045, %v1031
    %v1054 = vld [vmem:[%s7] sm:$0xff]
    %v1055 = vld [vmem:[%s7 + $0x8] sm:$0xff]
    %v1056 = vld [vmem:[%s7 + $0x10] sm:$0xff]
    %v1057 = vld [vmem:[%s7 + $0x18] sm:$0xff]
    %v1058 = vld [vmem:[%s7 + $0x20] sm:$0xff]
    %v1059 = vld [vmem:[%s7 + $0x28] sm:$0xff]
    %v1060 = vld [vmem:[%s7 + $0x30] sm:$0xff]
    %v1061 = vld [vmem:[%s7 + $0x38] sm:$0xff]
    %v1062 = vld [vmem:[%s7 + $0x40] sm:$0xff]
    %v1063 = vld [vmem:[%s7 + $0x48] sm:$0xff]
    %v1064 = vld [vmem:[%s7 + $0x50] sm:$0xff]
    %v1065 = vld [vmem:[%s7 + $0x58] sm:$0xff]
    %v1066 = vld [vmem:[%s7 + $0x60] sm:$0xff]
    %v1067 = vld [vmem:[%s7 + $0x68] sm:$0xff]
    %v1068 = vld [vmem:[%s7 + $0x70] sm:$0xff]
    %v1069 = vld [vmem:[%s7 + $0x78] sm:$0xff]
    %v1070 = vld [vmem:[%s7 + $0x80] sm:$0xff]
    %v1071 = vld [vmem:[%s7 + $0x88] sm:$0xff]
    %v1072 = vld [vmem:[%s7 + $0x90] sm:$0xff]
    %v1073 = vld [vmem:[%s7 + $0x98] sm:$0xff]
    %v1074 = vld [vmem:[%s7 + $0xa0] sm:$0xff]
    %v1075 = vld [vmem:[%s7 + $0xa8] sm:$0xff]
    %v1076 = vld [vmem:[%s7 + $0xb0] sm:$0xff]
    %v1077 = vld [vmem:[%s7 + $0xb8] sm:$0xff]
    %v1078 = vld [vmem:[%s7 + $0xc0] sm:$0xff]
    %v1079 = vld [vmem:[%s7 + $0xc8] sm:$0xff]
    %v1080 = vld [vmem:[%s7 + $0xd0] sm:$0xff]
    %v1081 = vld [vmem:[%s7 + $0xd8] sm:$0xff]
    %v1082 = vld [vmem:[%s7 + $0xe0] sm:$0xff]
    %v1083 = vld [vmem:[%s7 + $0xe8] sm:$0xff]
    %v1084 = vld [vmem:[%s7 + $0xf0] sm:$0xff]
    %v1085 = vld [vmem:[%s7 + $0xf8] sm:$0xff]
    %v1086 = vld [vmem:[%s8] sm:$0x1]
    %v1088 = vlaneseq
    %v1089 = vshrl.u32 %v1088, 7
    %v1090 = vsub.s32 0, %v1089
    %v1091 = vrot.slane %v1086, %v1090
    %1093 = vmatprep.subr.mxu0 0.0
    %1094 = vmatpush1.msra.mxu0 %v1054
    %1095 = vmatprep.subr.mxu0 0.0
    %1096 = vmatpush1.msra.mxu0 %v1055
    %1097 = vmatprep.subr.mxu0 0.0
    %1098 = vmatpush1.msra.mxu0 %v1056
    %1099 = vmatprep.subr.mxu0 0.0
    %1100 = vmatpush1.msra.mxu0 %v1057
    %1101 = vmatprep.subr.mxu0 0.0
    %1102 = vmatpush1.msra.mxu0 %v1058
    %1103 = vmatprep.subr.mxu0 0.0
    %1104 = vmatpush1.msra.mxu0 %v1059
    %1105 = vmatprep.subr.mxu0 0.0
    %1106 = vmatpush1.msra.mxu0 %v1060
    %1107 = vmatprep.subr.mxu0 0.0
    %1108 = vmatpush1.msra.mxu0 %v1061
    %1109 = vmatprep.subr.mxu0 0.0
    %1110 = vmatpush1.msra.mxu0 %v1062
    %1111 = vmatprep.subr.mxu0 0.0
    %1112 = vmatpush1.msra.mxu0 %v1063
    %1113 = vmatprep.subr.mxu0 0.0
    %1114 = vmatpush1.msra.mxu0 %v1064
    %1115 = vmatprep.subr.mxu0 0.0
    %1116 = vmatpush1.msra.mxu0 %v1065
    %1117 = vmatprep.subr.mxu0 0.0
    %1118 = vmatpush1.msra.mxu0 %v1066
    %1119 = vmatprep.subr.mxu0 0.0
    %1120 = vmatpush1.msra.mxu0 %v1067
    %1121 = vmatprep.subr.mxu0 0.0
    %1122 = vmatpush1.msra.mxu0 %v1068
    %1123 = vmatprep.subr.mxu0 0.0
    %1124 = vmatpush1.msra.mxu0 %v1069
    %1125 = vmatprep.subr.mxu0 0.0
    %1126 = vmatpush1.msra.mxu0 %v1070
    %1127 = vmatprep.subr.mxu0 0.0
    %1128 = vmatpush1.msra.mxu0 %v1071
    %1129 = vmatprep.subr.mxu0 0.0
    %1130 = vmatpush1.msra.mxu0 %v1072
    %1131 = vmatprep.subr.mxu0 0.0
    %1132 = vmatpush1.msra.mxu0 %v1073
    %1133 = vmatprep.subr.mxu0 0.0
    %1134 = vmatpush1.msra.mxu0 %v1074
    %1135 = vmatprep.subr.mxu0 0.0
    %1136 = vmatpush1.msra.mxu0 %v1075
    %1137 = vmatprep.subr.mxu0 0.0
    %1138 = vmatpush1.msra.mxu0 %v1076
    %1139 = vmatprep.subr.mxu0 0.0
    %1140 = vmatpush1.msra.mxu0 %v1077
    %1141 = vmatprep.subr.mxu0 0.0
    %1142 = vmatpush1.msra.mxu0 %v1078
    %1143 = vmatprep.subr.mxu0 0.0
    %1144 = vmatpush1.msra.mxu0 %v1079
    %1145 = vmatprep.subr.mxu0 0.0
    %1146 = vmatpush1.msra.mxu0 %v1080
    %1147 = vmatprep.subr.mxu0 0.0
    %1148 = vmatpush1.msra.mxu0 %v1081
    %1149 = vmatprep.subr.mxu0 0.0
    %1150 = vmatpush1.msra.mxu0 %v1082
    %1151 = vmatprep.subr.mxu0 0.0
    %1152 = vmatpush1.msra.mxu0 %v1083
    %1153 = vmatprep.subr.mxu0 0.0
    %1154 = vmatpush1.msra.mxu0 %v1084
    %1155 = vmatprep.subr.mxu0 0.0
    %1156 = vmatpush1.msra.mxu0 %v1085
    %1157 = vmatprep.mubr.f32.mxu0 %v1052
    %1158 = vmatmul.mubr.f32.gmra.mrb[0].mxu0 %v1048
    %v1159 = vpop.f32.mrb[0].mxu0
    %v1160 = vadd.f32 %v1091, %v1159
    %v1161 = vpop.f32.mrb[0].mxu0
    %1162 = vdwg.mxu0
    %vm1163 = vcmask 33792
    %1164 = vst.msk [vmem:[#allocation2] sm:$0x3] %vm1163, %v1160
    // Predicated region
    $region38: #{tpu_custom_call.1} parent=1 // pred_check
      _
    $region39: #{tpu_custom_call.1} parent=1 // pred_check_branch
      %1166 = sbr.rel (0) target = $region41
    $region40: #{tpu_custom_call.1} parent=1 // pred_region
      %s1168 = ssub.s32 32, 32
      %1169 = vsyncadd [#allocation3], %s1168
      %s1171 = sshll.u32 [#allocation2], 4
      %s1172 = int_to_ptr.vmem [resolvable:$true] %s1171
      %1174 = dma.vmem_to_hbm [thread:$0]  %s1172, 32, %s9, [#allocation3]
    $region41: #{tpu_custom_call.1} parent=1 // pred_fallthru
      _
    // Predicated region
    $region42: #{tpu_custom_call.1} parent=1 // pred_check
      _
    $region43: #{tpu_custom_call.1} parent=1 // pred_check_branch
      %1176 = sbr.rel (0) target = $region45
    $region44: #{tpu_custom_call.1} parent=1 // pred_region
      %1177 = dma.done [#allocation3], 32
    $region45: #{tpu_custom_call.1} parent=1 // pred_fallthru
      _
    %1178 = vsyncpa [#allocation3], 1

</llo_original>
